<compile_context>
chip_gen: v6e
topology: v6e:2x2x1
jax: 0.10.0
libtpu: 0.0.40
codegen_flags: <defaults>
</compile_context>

<pallas_src>
import functools

import jax
import jax.numpy as jnp
from jax import lax
from jax.experimental import pallas as pl
from jax.experimental.pallas import tpu as pltpu

_PAD_LOGIT = -1e4  # not used for padding copies anymore; kept for reference


def _varifocal_kernel(pred_ref, gt_ref, label_ref, out_ref, *, alpha, gamma,
                      n_valid, n_blk, ragged):
    i = pl.program_id(1)  # reduction (arbitrary) axis over N-blocks

    @pl.when(i == 0)
    def _init():
        out_ref[...] = jnp.zeros_like(out_ref)

    x = pred_ref[...].astype(jnp.float32)      # (1, n_blk, C) logits
    z = gt_ref[...].astype(jnp.float32)        # gt score (BCE target)
    lbl = label_ref[...].astype(jnp.float32)   # label mask

    # One exponential per element, shared by the stable sigmoid and stable BCE.
    e = jnp.exp(-jnp.abs(x))
    inv_1pe = pl.reciprocal(1.0 + e, approx=True)    # single EUP vrcp
    p = jnp.where(x >= 0.0, 1.0, e) * inv_1pe        # numerically-stable sigmoid

    # sigmoid(x) ** gamma without the log/exp path when gamma is integral.
    if gamma == 2.0:
        p_pow = p * p
    elif float(gamma).is_integer() and gamma > 0:
        p_pow = p
        for _ in range(int(gamma) - 1):
            p_pow = p_pow * p
    else:
        p_pow = jnp.power(p, gamma)

    weight = alpha * p_pow * (1.0 - lbl) + z * lbl
    # Stable BCE-with-logits, reduction='none': max(x,0) - x*z + log1p(exp(-|x|))
    bce = jnp.maximum(x, 0.0) - x * z + jnp.log1p(e)
    val = bce * weight                               # (1, n_blk, C)

    if ragged:
        # Tail block extends past N: Pallas pads the read with garbage; select
        # it away (masked-off lanes may carry NaN/Inf — where() discards them).
        row = i * n_blk + lax.broadcasted_iota(jnp.int32, val.shape, 1)
        val = jnp.where(row < n_valid, val, 0.0)

    c = val.shape[-1]
    # Elementwise accumulate into the resident (1, 8, C) output block: pure VPU
    # adds over sublane groups; the cross-lane reduce happens once, in the wrapper.
    out_ref[...] += val.reshape(n_blk // 8, 8, c).sum(axis=0)[None]


def _round_up(x, m):
    return (x + m - 1) // m * m


def _vmem_capacity_bytes():
    try:
        return int(pltpu.get_tpu_info().vmem_capacity_bytes)
    except Exception:
        return 64 << 20  # conservative (v7x per-core VMEM)


def varifocal_loss(pred_score, gt_score, label, alpha=0.75, gamma=2.0):
    """Pallas TPU VarifocalLoss. Returns a scalar float32 loss."""
    pred_score = jnp.asarray(pred_score)
    gt_score = jnp.asarray(gt_score)
    label = jnp.asarray(label)
    if label.dtype == jnp.bool_:
        label = label.astype(jnp.bfloat16)   # 0/1 mask: a 2-byte stream is plenty
    assert pred_score.shape == gt_score.shape == label.shape
    assert pred_score.ndim == 3, "expected (batch, anchors, classes)"
    B, N, C = pred_score.shape

    # --- generation-dependent tile budget --------------------------------------
    vmem_phys = _vmem_capacity_bytes()
    if vmem_phys >= (100 << 20):             # v5e / v6e: 128 MiB physical VMEM
        per_block_budget = 4 << 20           # lane-padded f32 bytes per input block
        vmem_limit = 96 << 20
    else:                                    # v7x: 64 MiB physical VMEM
        per_block_budget = 2 << 20
        vmem_limit = 48 << 20

    lane_bytes = _round_up(C, 128) * 4       # VMEM row footprint (f32, lane-padded)
    max_rows = max(32, (per_block_budget // lane_bytes) // 32 * 32)
    n_blk = min(max_rows, _round_up(N, 32))  # multiple of 32: safe for f32/bf16/i8 tiling
    n_blocks = pl.cdiv(N, n_blk)
    ragged = (N % n_blk) != 0

    kernel = functools.partial(
        _varifocal_kernel, alpha=float(alpha), gamma=float(gamma),
        n_valid=N, n_blk=n_blk, ragged=ragged)

    in_bytes = sum(int(a.size) * a.dtype.itemsize
                   for a in (pred_score, gt_score, label))
    out_bytes = B * 8 * C * 4

    out = pl.pallas_call(
        kernel,
        out_shape=jax.ShapeDtypeStruct((B, 8, C), jnp.float32),
        grid_spec=pltpu.PrefetchScalarGridSpec(
            num_scalar_prefetch=0,
            grid=(B, n_blocks),
            in_specs=[pl.BlockSpec((1, n_blk, C), lambda b, i: (b, i, 0))
                      for _ in range(3)],
            # Resident per-b accumulator block: revisited across the reduction
            # axis, distinct per parallel b -> no cross-core race on v7x.
            out_specs=pl.BlockSpec((1, 8, C), lambda b, i: (b, 0, 0)),
        ),
        compiler_params=pltpu.CompilerParams(
            dimension_semantics=("parallel", "arbitrary"),
            vmem_limit_bytes=vmem_limit,
        ),
        cost_estimate=pl.CostEstimate(
            flops=15 * B * N * C,
            transcendentals=3 * B * N * C,
            bytes_accessed=in_bytes + out_bytes,
        ),
    )(pred_score, gt_score, label)

    # mean over the anchor axis (dim 1) then sum over batch & classes == sum / N.
    # Tiny (B*8*C) reduce done outside the kernel.
    return jnp.sum(out) / N


def _reference(pred_score, gt_score, label, alpha=0.75, gamma=2.0):
    """Pure-JAX reference for a sanity check."""
    x = jnp.asarray(pred_score, jnp.float32)
    z = jnp.asarray(gt_score, jnp.float32)
    lbl = jnp.asarray(label, jnp.float32)
    weight = alpha * jax.nn.sigmoid(x) ** gamma * (1.0 - lbl) + z * lbl
    bce = jnp.maximum(x, 0.0) - x * z + jnp.log1p(jnp.exp(-jnp.abs(x)))
    return jnp.sum(jnp.mean(bce * weight, axis=1))


if __name__ == "__main__":
    key = jax.random.PRNGKey(0)
    k1, k2, k3 = jax.random.split(key, 3)

    # Small shapes: batch=2, anchors=8, classes=16.
    B, N, C = 2, 8, 16
    pred_score = jax.random.normal(k1, (B, N, C), dtype=jnp.float32)
    gt_score = jax.random.uniform(k2, (B, N, C), dtype=jnp.float32)
    label = (jax.random.uniform(k3, (B, N, C)) > 0.5).astype(jnp.float32)

    loss = jax.block_until_ready(varifocal_loss(pred_score, gt_score, label))
    ref = _reference(pred_score, gt_score, label)
    assert jnp.allclose(loss, ref, rtol=2e-3, atol=2e-3), (loss, ref)

    # Ragged-N, single-block-per-b path (typical detector shapes), f32 inputs.
    kk1, kk2, kk3 = jax.random.split(jax.random.PRNGKey(1), 3)
    B2, N2, C2 = 4, 2100, 80
    p2 = jax.random.normal(kk1, (B2, N2, C2), dtype=jnp.float32)
    g2 = jax.random.uniform(kk2, (B2, N2, C2), dtype=jnp.float32)
    m2 = (jax.random.uniform(kk3, (B2, N2, C2)) > 0.9).astype(jnp.float32)
    loss2 = jax.block_until_ready(varifocal_loss(p2, g2, m2))
    ref2 = _reference(p2, g2, m2)
    assert jnp.allclose(loss2, ref2, rtol=2e-3, atol=2e-3), (loss2, ref2)

    # Multi-block accumulation path with mixed dtypes (bf16 gt / label streams).
    kj1, kj2, kj3 = jax.random.split(jax.random.PRNGKey(2), 3)
    B3, N3, C3 = 2, 20000, 80
    p3 = jax.random.normal(kj1, (B3, N3, C3), dtype=jnp.float32)
    g3 = jax.random.uniform(kj2, (B3, N3, C3), dtype=jnp.float32).astype(jnp.bfloat16)
    m3 = (jax.random.uniform(kj3, (B3, N3, C3)) > 0.9).astype(jnp.bfloat16)
    loss3 = jax.block_until_ready(varifocal_loss(p3, g3, m3))
    ref3 = _reference(p3, g3, m3)
    assert jnp.allclose(loss3, ref3, rtol=5e-3, atol=5e-3), (loss3, ref3)

    print("KERNEL_OK")
</pallas_src>

<mosaic_0001>
module attributes {stable_mosaic.version = 11 : i64} {
  func.func @_varifocal_kernel(%arg0: i32, %arg1: i32, %arg2: memref<1x32x16xf32, #tpu.memory_space<vmem>>, %arg3: memref<1x32x16xf32, #tpu.memory_space<vmem>>, %arg4: memref<1x32x16xf32, #tpu.memory_space<vmem>>, %arg5: memref<1x8x16xf32, #tpu.memory_space<vmem>>) attributes {dimension_semantics = [#tpu.dimension_semantics<parallel>, #tpu.dimension_semantics<arbitrary>], iteration_bounds = array<i64: 2, 1>, scalar_prefetch = 0 : i64, scratch_operands = 0 : i64, tpu.core_type = #tpu.core_type<tc>, window_params = [{transform_indices = @transform_0, window_bounds = array<i64: 1, 32, 16>}, {transform_indices = @transform_1, window_bounds = array<i64: 1, 32, 16>}, {transform_indices = @transform_2, window_bounds = array<i64: 1, 32, 16>}, {transform_indices = @transform_3, window_bounds = array<i64: 1, 8, 16>}]} {
    %c0_i32 = arith.constant 0 : i32
    %0 = arith.cmpi eq, %arg1, %c0_i32 : i32
    %1 = arith.extui %0 : i1 to i32
    %c0_i32_0 = arith.constant 0 : i32
    %2 = arith.cmpi ne, %1, %c0_i32_0 : i32
    scf.if %2 {
      %cst_23 = arith.constant 0.000000e+00 : f32
      %47 = vector.broadcast %cst_23 : f32 to vector<1x8x16xf32>
      %c0_24 = arith.constant 0 : index
      %c0_25 = arith.constant 0 : index
      %c0_26 = arith.constant 0 : index
      %48 = vector.load %arg5[%c0_24, %c0_25, %c0_26] : memref<1x8x16xf32, #tpu.memory_space<vmem>>, vector<1x8x16xf32>
      tpu.vector_store %arg5[%c0_24, %c0_25, %c0_26], %47 {strides = array<i32>} : memref<1x8x16xf32, #tpu.memory_space<vmem>>, vector<1x8x16xf32>,
    } else {
    }
    %c0 = arith.constant 0 : index
    %c0_1 = arith.constant 0 : index
    %c0_2 = arith.constant 0 : index
    %3 = vector.load %arg2[%c0, %c0_1, %c0_2] : memref<1x32x16xf32, #tpu.memory_space<vmem>>, vector<1x32x16xf32>
    %c0_3 = arith.constant 0 : index
    %c0_4 = arith.constant 0 : index
    %c0_5 = arith.constant 0 : index
    %4 = vector.load %arg3[%c0_3, %c0_4, %c0_5] : memref<1x32x16xf32, #tpu.memory_space<vmem>>, vector<1x32x16xf32>
    %c0_6 = arith.constant 0 : index
    %c0_7 = arith.constant 0 : index
    %c0_8 = arith.constant 0 : index
    %5 = vector.load %arg4[%c0_6, %c0_7, %c0_8] : memref<1x32x16xf32, #tpu.memory_space<vmem>>, vector<1x32x16xf32>
    %6 = math.absf %3 : vector<1x32x16xf32>
    %cst = arith.constant 0.000000e+00 : f32
    %7 = vector.broadcast %cst : f32 to vector<1x32x16xf32>
    %8 = arith.subf %7, %6 : vector<1x32x16xf32>
    %9 = math.exp %8 : vector<1x32x16xf32>
    %cst_9 = arith.constant 1.000000e+00 : f32
    %10 = vector.broadcast %cst_9 : f32 to vector<1x32x16xf32>
    %11 = arith.addf %10, %9 : vector<1x32x16xf32>
    %12 = tpu.reciprocal %11 {approx = true} : vector<1x32x16xf32> -> vector<1x32x16xf32>
    %cst_10 = arith.constant 0.000000e+00 : f32
    %13 = vector.broadcast %cst_10 : f32 to vector<1x32x16xf32>
    %14 = arith.cmpf oge, %3, %13 : vector<1x32x16xf32>
    %cst_11 = arith.constant 1.000000e+00 : f32
    %15 = vector.broadcast %cst_11 : f32 to vector<1x32x16xf32>
    %16 = arith.select %14, %15, %9 : vector<1x32x16xi1>, vector<1x32x16xf32>
    %17 = arith.mulf %16, %12 : vector<1x32x16xf32>
    %18 = arith.mulf %17, %17 : vector<1x32x16xf32>
    %cst_12 = arith.constant 7.500000e-01 : f32
    %19 = vector.broadcast %cst_12 : f32 to vector<1x32x16xf32>
    %20 = arith.mulf %19, %18 : vector<1x32x16xf32>
    %cst_13 = arith.constant 1.000000e+00 : f32
    %21 = vector.broadcast %cst_13 : f32 to vector<1x32x16xf32>
    %22 = arith.subf %21, %5 : vector<1x32x16xf32>
    %23 = arith.mulf %20, %22 : vector<1x32x16xf32>
    %24 = arith.mulf %4, %5 : vector<1x32x16xf32>
    %25 = arith.addf %23, %24 : vector<1x32x16xf32>
    %cst_14 = arith.constant 0.000000e+00 : f32
    %26 = vector.broadcast %cst_14 : f32 to vector<1x32x16xf32>
    %27 = arith.maximumf %3, %26 : vector<1x32x16xf32>
    %28 = arith.mulf %3, %4 : vector<1x32x16xf32>
    %29 = arith.subf %27, %28 : vector<1x32x16xf32>
    %30 = math.log1p %9 : vector<1x32x16xf32>
    %31 = arith.addf %29, %30 : vector<1x32x16xf32>
    %32 = arith.mulf %31, %25 : vector<1x32x16xf32>
    %c32_i32 = arith.constant 32 : i32
    %33 = arith.muli %arg1, %c32_i32 : i32
    %34 = tpu.iota {dimensions = array<i32: 1>} : vector<1x32x16xi32>
    %35 = vector.broadcast %33 : i32 to vector<1x32x16xi32>
    %36 = arith.addi %35, %34 : vector<1x32x16xi32>
    %c8_i32 = arith.constant 8 : i32
    %37 = vector.broadcast %c8_i32 : i32 to vector<1x32x16xi32>
    %38 = arith.cmpi slt, %36, %37 : vector<1x32x16xi32>
    %cst_15 = arith.constant 0.000000e+00 : f32
    %39 = vector.broadcast %cst_15 : f32 to vector<1x32x16xf32>
    %40 = arith.select %38, %32, %39 : vector<1x32x16xi1>, vector<1x32x16xf32>
    %c0_16 = arith.constant 0 : index
    %c0_17 = arith.constant 0 : index
    %c0_18 = arith.constant 0 : index
    %41 = vector.load %arg5[%c0_16, %c0_17, %c0_18] : memref<1x8x16xf32, #tpu.memory_space<vmem>>, vector<1x8x16xf32>
    %42 = vector.shape_cast %40 : vector<1x32x16xf32> to vector<4x8x16xf32>
    %cst_19 = arith.constant dense<0.000000e+00> : vector<8x16xf32>
    %43 = vector.multi_reduction <add>, %42, %cst_19 [0] : vector<4x8x16xf32> to vector<8x16xf32>
    %44 = vector.shape_cast %43 : vector<8x16xf32> to vector<1x8x16xf32>
    %45 = arith.addf %41, %44 : vector<1x8x16xf32>
    %c0_20 = arith.constant 0 : index
    %c0_21 = arith.constant 0 : index
    %c0_22 = arith.constant 0 : index
    %46 = vector.load %arg5[%c0_20, %c0_21, %c0_22] : memref<1x8x16xf32, #tpu.memory_space<vmem>>, vector<1x8x16xf32>
    tpu.vector_store %arg5[%c0_20, %c0_21, %c0_22], %45 {strides = array<i32>} : memref<1x8x16xf32, #tpu.memory_space<vmem>>, vector<1x8x16xf32>,
    return
  }
  func.func @transform_0(%arg0: i32, %arg1: i32) -> (i32, i32, i32) {
    %c0_i32 = arith.constant 0 : i32
    %c0_i32_0 = arith.constant 0 : i32
    return %arg0, %arg1, %c0_i32 : i32, i32, i32
  }
  func.func @transform_1(%arg0: i32, %arg1: i32) -> (i32, i32, i32) {
    %c0_i32 = arith.constant 0 : i32
    %c0_i32_0 = arith.constant 0 : i32
    return %arg0, %arg1, %c0_i32 : i32, i32, i32
  }
  func.func @transform_2(%arg0: i32, %arg1: i32) -> (i32, i32, i32) {
    %c0_i32 = arith.constant 0 : i32
    %c0_i32_0 = arith.constant 0 : i32
    return %arg0, %arg1, %c0_i32 : i32, i32, i32
  }
  func.func @transform_3(%arg0: i32, %arg1: i32) -> (i32, i32, i32) {
    %c0_i32 = arith.constant 0 : i32
    %c0_i32_0 = arith.constant 0 : i32
    %c0_i32_1 = arith.constant 0 : i32
    return %arg0, %c0_i32, %c0_i32_0 : i32, i32, i32
  }
}

</mosaic_0001>

<llo_original>
// kernel: tpu_custom_call.1
$region0: #{tpu_custom_call.1}
  #allocation0 [shape = 'u32[]', space=smem, size = 0x4, offset = 0x4, fixed_abs, tag = 'smem constant byte address 0x4 - core index']
  #allocation1 [shape = 'u32[144,128]{1,0:T(1,128)}', space=vmem, size = 0x12000, scoped, tag = 'internal scratch']
  %s0 = inlined_call_operand.hbm [shape: f32[2,8,16], index: 0, kind: input, shape index: {}]
  %s1 = inlined_call_operand.hbm [shape: f32[2,8,16], index: 1, kind: input, shape index: {}]
  %s2 = inlined_call_operand.hbm [shape: f32[2,8,16], index: 2, kind: input, shape index: {}]
  %s3 = inlined_call_operand.hbm [shape: f32[2,8,16], index: 3, kind: output, shape index: {}]
  %s4 = sld [smem:[#allocation0]]
  $region61: #{tpu_custom_call.1} parent=0
    _
  %s6 = ssub.s32 1, %s4
  %s7 = scalar_select 0, %s6, %s4
  $region1: #{tpu_custom_call.1} parent=0
    #allocation2 [shape = 'u8[32768]{0}', space=vmem, size = 0x8000, scoped, tag = 'input window, operand 0']
    #allocation3 [shape = 's32[2]{0}', space=sflag, size = 0x8, scoped, tag = 'scoped memory for tpu_custom_call.1']
    #allocation4 [shape = 's32[2]{0}', space=sflag, size = 0x8, scoped, tag = 'scoped memory for tpu_custom_call.1']
    #allocation5 [shape = 'u8[32768]{0}', space=vmem, size = 0x8000, scoped, tag = 'input window, operand 1']
    #allocation6 [shape = 's32[2]{0}', space=sflag, size = 0x8, scoped, tag = 'scoped memory for tpu_custom_call.1']
    #allocation7 [shape = 'u8[32768]{0}', space=vmem, size = 0x8000, scoped, tag = 'input window, operand 2']
    #allocation8 [shape = 'u8[8192]{0}', space=vmem, size = 0x2000, scoped, tag = 'output window, operand 0']
    %8 = vsyncpa [#allocation3], 0
    %s9 = scalar_lea.sflag [#allocation3], 1
    %10 = vsyncpa %s9, 0
    %11 = vsyncpa [#allocation6], 0
    %s12 = scalar_lea.sflag [#allocation6], 1
    %13 = vsyncpa %s12, 0
    %14 = vsyncpa [#allocation4], 0
    %s15 = scalar_lea.sflag [#allocation4], 1
    %16 = vsyncpa %s15, 0
    loop: start=0, step=1, limit=4
    $region2: #{tpu_custom_call.1} parent=1 // loop_pre_header
      _
    $region3: #{tpu_custom_call.1} parent=1 // loop_header
      %s18 = sphi 0, %s22
      %p19 = scmp.ge.s32.totalorder %s18, 4
      %s25 = sphi 0, %s37
      %s26 = sphi 0, %s33
      %s27 = sphi 0, %s25
      %s28 = sphi 0, %s26
      %s29 = sphi 0, %s27
      %s30 = sphi 0, %s28
      %s42 = sphi 0, %s44
      %s45 = sphi 0, %s42
      %s46 = sphi 0, %s45
      %s62 = sphi 0, %s46
      %s70 = sphi 0, %s72
      %s73 = sphi 0, %s70
      %s74 = sphi 0, %s73
      %s90 = sphi 0, %s74
      %s98 = sphi 0, %s100
      %s101 = sphi 0, %s98
      %s102 = sphi 0, %s101
      %s118 = sphi 0, %s102
      %s124 = sphi 0, %s126
      %s127 = sphi 0, %s124
      %s128 = sphi 0, %s127
      %s144 = sphi 0, %s128
    $region4: #{tpu_custom_call.1} parent=1 // loop_header_branch
      %21 = sbr.rel (%p19) target = $region8
    $region5: #{tpu_custom_call.1} parent=1 // loop_body
      %s23 = ssub.s32 %s18, 1
      %s24 = ssub.s32 %s18, 2
      %s31 = sadd.s32 1, %s26
      %p32 = scmp.ge.s32.totalorder %s31, 1
      %s33 = scalar_select %p32, 0, %s31
      %s34 = sadd.s32 1, %s25
      %s35 = scalar_select %p32, %s34, %s25
      %p36 = scmp.ge.s32.totalorder %s35, 2
      %s37 = scalar_select %p36, 0, %s35
      %s38 = ssub.s32 %s25, %s37
      %s39 = ssub.s32 %s26, %s33
      %s40 = sor.u32 %s38, %s39
      %p41 = scmp.eq.s32.totalorder %s40, 0
      %s43 = sadd.s32 %s42, 1
      %s44 = scalar_select %p41, %s42, %s43
      %p47 = pneg %p41
      %p48 = scmp.eq.s32.totalorder %s18, 1
      %p49 = por %p47, %p48
      %p50 = scmp.ne.s32.totalorder %s42, %s45
      %p51 = scmp.eq.s32.totalorder %s18, 0
      %p52 = por %p50, %p51
      %p53 = scmp.ne.s32.totalorder %s42, %s45
      %p54 = scmp.eq.s32.totalorder %s23, 1
      %p55 = por %p53, %p54
      %p56 = scmp.ne.s32.totalorder %s45, %s46
      %p57 = scmp.eq.s32.totalorder %s23, 0
      %p58 = por %p56, %p57
      %p59 = scmp.ne.s32.totalorder %s45, %s46
      %p60 = scmp.eq.s32.totalorder %s24, 1
      %p61 = por %p59, %p60
      %p63 = scmp.ne.s32.totalorder %s46, %s62
      %p64 = scmp.eq.s32.totalorder %s24, 0
      %p65 = por %p63, %p64
      %s66 = ssub.s32 %s25, %s37
      %s67 = ssub.s32 %s26, %s33
      %s68 = sor.u32 %s66, %s67
      %p69 = scmp.eq.s32.totalorder %s68, 0
      %s71 = sadd.s32 %s70, 1
      %s72 = scalar_select %p69, %s70, %s71
      %p75 = pneg %p69
      %p76 = scmp.eq.s32.totalorder %s18, 1
      %p77 = por %p75, %p76
      %p78 = scmp.ne.s32.totalorder %s70, %s73
      %p79 = scmp.eq.s32.totalorder %s18, 0
      %p80 = por %p78, %p79
      %p81 = scmp.ne.s32.totalorder %s70, %s73
      %p82 = scmp.eq.s32.totalorder %s23, 1
      %p83 = por %p81, %p82
      %p84 = scmp.ne.s32.totalorder %s73, %s74
      %p85 = scmp.eq.s32.totalorder %s23, 0
      %p86 = por %p84, %p85
      %p87 = scmp.ne.s32.totalorder %s73, %s74
      %p88 = scmp.eq.s32.totalorder %s24, 1
      %p89 = por %p87, %p88
      %p91 = scmp.ne.s32.totalorder %s74, %s90
      %p92 = scmp.eq.s32.totalorder %s24, 0
      %p93 = por %p91, %p92
      %s94 = ssub.s32 %s25, %s37
      %s95 = ssub.s32 %s26, %s33
      %s96 = sor.u32 %s94, %s95
      %p97 = scmp.eq.s32.totalorder %s96, 0
      %s99 = sadd.s32 %s98, 1
      %s100 = scalar_select %p97, %s98, %s99
      %p103 = pneg %p97
      %p104 = scmp.eq.s32.totalorder %s18, 1
      %p105 = por %p103, %p104
      %p106 = scmp.ne.s32.totalorder %s98, %s101
      %p107 = scmp.eq.s32.totalorder %s18, 0
      %p108 = por %p106, %p107
      %p109 = scmp.ne.s32.totalorder %s98, %s101
      %p110 = scmp.eq.s32.totalorder %s23, 1
      %p111 = por %p109, %p110
      %p112 = scmp.ne.s32.totalorder %s101, %s102
      %p113 = scmp.eq.s32.totalorder %s23, 0
      %p114 = por %p112, %p113
      %p115 = scmp.ne.s32.totalorder %s101, %s102
      %p116 = scmp.eq.s32.totalorder %s24, 1
      %p117 = por %p115, %p116
      %p119 = scmp.ne.s32.totalorder %s102, %s118
      %p120 = scmp.eq.s32.totalorder %s24, 0
      %p121 = por %p119, %p120
      %s122 = ssub.s32 %s25, %s37
      %p123 = scmp.eq.s32.totalorder %s122, 0
      %s125 = sadd.s32 %s124, 1
      %s126 = scalar_select %p123, %s124, %s125
      %p129 = pneg %p123
      %p130 = scmp.eq.s32.totalorder %s18, 1
      %p131 = por %p129, %p130
      %p132 = scmp.ne.s32.totalorder %s124, %s127
      %p133 = scmp.eq.s32.totalorder %s18, 0
      %p134 = por %p132, %p133
      %p135 = scmp.ne.s32.totalorder %s124, %s127
      %p136 = scmp.eq.s32.totalorder %s23, 1
      %p137 = por %p135, %p136
      %p138 = scmp.ne.s32.totalorder %s127, %s128
      %p139 = scmp.eq.s32.totalorder %s23, 0
      %p140 = por %p138, %p139
      %p141 = scmp.ne.s32.totalorder %s127, %s128
      %p142 = scmp.eq.s32.totalorder %s24, 1
      %p143 = por %p141, %p142
      %p145 = scmp.ne.s32.totalorder %s128, %s144
      %p146 = scmp.eq.s32.totalorder %s24, 0
      %p147 = por %p145, %p146
      %p148 = scmp.le.s32.totalorder 1, %s18
      %p149 = scmp.lt.s32.totalorder %s18, 3
      %p150 = pnand %p148, %p149
      %p151 = pneg %p150
      // Predicated region
      $region9: #{tpu_custom_call.1} parent=5 // pred_check
        _
      $region10: #{tpu_custom_call.1} parent=5 // pred_check_branch
        %153 = sbr.rel (%p150) target = $region12
      $region11: #{tpu_custom_call.1} parent=5 // pred_region
        %s154 = ssub.s32 %s18, 1
      $region12: #{tpu_custom_call.1} parent=5 // pred_fallthru
        _
      %p155 = scmp.lt.s32.totalorder %s18, 2
      // Predicated region
      $region13: #{tpu_custom_call.1} parent=5 // pred_check
        %p156 = pneg %p155
      $region14: #{tpu_custom_call.1} parent=5 // pred_check_branch
        %158 = sbr.rel (%p156) target = $region16
      $region15: #{tpu_custom_call.1} parent=5 // pred_region
        // Predicated region
        $region17: #{tpu_custom_call.1} parent=15 // pred_check
          %p159 = pneg %p52
        $region18: #{tpu_custom_call.1} parent=15 // pred_check_branch
          %161 = sbr.rel (%p159) target = $region20
        $region19: #{tpu_custom_call.1} parent=15 // pred_region
          %s162 = sand.u32 %s42, 1
          %s163 = scalar_lea.sflag [#allocation3], %s162
          %s164 = sand.u32 %s42, 1
          %s165 = smul.addr %s164, 32
          %s166 = scalar_lea.vmem [#allocation2], %s165
          %s167 = smul.u32 4, %s26
          %s168 = ssub.s32 1, %s167
          %s169 = smul.u32 128, %s168
          %s171 = ssub.s32 512, %s169
          %172 = vsyncadd %s163, %s171
          %p173 = scmp.ne.s32.totalorder 0, %s169
          %s174 = sadd.s32 %s167, %s25
          %s175 = smul.addr %s174, 128
          %s176 = scalar_lea.hbm %s0, %s175
          %s177 = smul.u32 8, %s168
          %s178 = sshll.u32 %s166, 4
          %s179 = int_to_ptr.vmem [resolvable:$true] %s178
          %s180 = sshll.u32 %s177, 4
          %184 = dma.hbm_to_vmem [thread:$0]  (%p173), %s176, %s180, %s179, %s163, 128, 128, 8
        $region20: #{tpu_custom_call.1} parent=15 // pred_fallthru
          _
        // Predicated region
        $region21: #{tpu_custom_call.1} parent=15 // pred_check
          %p185 = pneg %p80
        $region22: #{tpu_custom_call.1} parent=15 // pred_check_branch
          %187 = sbr.rel (%p185) target = $region24
        $region23: #{tpu_custom_call.1} parent=15 // pred_region
          %s188 = sand.u32 %s18, 1
          %s189 = scalar_lea.sflag [#allocation6], %s188
          %s190 = sand.u32 %s70, 1
          %s191 = smul.addr %s190, 32
          %s192 = scalar_lea.vmem [#allocation5], %s191
          %s193 = smul.u32 4, %s26
          %s194 = ssub.s32 1, %s193
          %s195 = smul.u32 128, %s194
          %s197 = ssub.s32 512, %s195
          %198 = vsyncadd %s189, %s197
          %p199 = scmp.ne.s32.totalorder 0, %s195
          %s200 = sadd.s32 %s193, %s25
          %s201 = smul.addr %s200, 128
          %s202 = scalar_lea.hbm %s1, %s201
          %s203 = smul.u32 8, %s194
          %s204 = sshll.u32 %s192, 4
          %s205 = int_to_ptr.vmem [resolvable:$true] %s204
          %s206 = sshll.u32 %s203, 4
          %210 = dma.hbm_to_vmem [thread:$0]  (%p199), %s202, %s206, %s205, %s189, 128, 128, 8
        $region24: #{tpu_custom_call.1} parent=15 // pred_fallthru
          _
        // Predicated region
        $region25: #{tpu_custom_call.1} parent=15 // pred_check
          %p211 = pneg %p108
        $region26: #{tpu_custom_call.1} parent=15 // pred_check_branch
          %213 = sbr.rel (%p211) target = $region28
        $region27: #{tpu_custom_call.1} parent=15 // pred_region
          %s214 = sand.u32 %s18, 1
          %s215 = scalar_lea.sflag [#allocation6], %s214
          %s216 = sand.u32 %s98, 1
          %s217 = smul.addr %s216, 32
          %s218 = scalar_lea.vmem [#allocation7], %s217
          %s219 = smul.u32 4, %s26
          %s220 = ssub.s32 1, %s219
          %s221 = smul.u32 128, %s220
          %s223 = ssub.s32 512, %s221
          %224 = vsyncadd %s215, %s223
          %p225 = scmp.ne.s32.totalorder 0, %s221
          %s226 = sadd.s32 %s219, %s25
          %s227 = smul.addr %s226, 128
          %s228 = scalar_lea.hbm %s2, %s227
          %s229 = smul.u32 8, %s220
          %s230 = sshll.u32 %s218, 4
          %s231 = int_to_ptr.vmem [resolvable:$true] %s230
          %s232 = sshll.u32 %s229, 4
          %236 = dma.hbm_to_vmem [thread:$0]  (%p225), %s228, %s232, %s231, %s215, 128, 128, 8
        $region28: #{tpu_custom_call.1} parent=15 // pred_fallthru
          _
      $region16: #{tpu_custom_call.1} parent=5 // pred_fallthru
        _
      %p237 = scmp.le.s32.totalorder 1, %s18
      %p238 = scmp.lt.s32.totalorder %s18, 3
      %p239 = pnand %p237, %p238
      %p240 = pneg %p239
      // Predicated region
      $region29: #{tpu_custom_call.1} parent=5 // pred_check
        _
      $region30: #{tpu_custom_call.1} parent=5 // pred_check_branch
        %242 = sbr.rel (%p239) target = $region32
      $region31: #{tpu_custom_call.1} parent=5 // pred_region
        %s243 = ssub.s32 %s18, 1
        %s244 = sand.u32 %s45, 1
        %s245 = scalar_lea.sflag [#allocation3], %s244
        %s246 = sand.u32 %s45, 1
        %s247 = smul.addr %s246, 32
        %s248 = scalar_lea.vmem [#allocation2], %s247
        // Predicated region
        $region33: #{tpu_custom_call.1} parent=31 // pred_check
          %p249 = pneg %p58
        $region34: #{tpu_custom_call.1} parent=31 // pred_check_branch
          %251 = sbr.rel (%p249) target = $region36
        $region35: #{tpu_custom_call.1} parent=31 // pred_region
          %252 = dma.done %s245, 512
        $region36: #{tpu_custom_call.1} parent=31 // pred_fallthru
          _
        %s253 = sand.u32 %s23, 1
        %s254 = scalar_lea.sflag [#allocation6], %s253
        %s255 = sand.u32 %s73, 1
        %s256 = smul.addr %s255, 32
        %s257 = scalar_lea.vmem [#allocation5], %s256
        // Predicated region
        $region37: #{tpu_custom_call.1} parent=31 // pred_check
          %p258 = pneg %p86
        $region38: #{tpu_custom_call.1} parent=31 // pred_check_branch
          %260 = sbr.rel (%p258) target = $region40
        $region39: #{tpu_custom_call.1} parent=31 // pred_region
          %261 = dma.done %s254, 512
        $region40: #{tpu_custom_call.1} parent=31 // pred_fallthru
          _
        %s262 = sand.u32 %s23, 1
        %s263 = scalar_lea.sflag [#allocation6], %s262
        %s264 = sand.u32 %s101, 1
        %s265 = smul.addr %s264, 32
        %s266 = scalar_lea.vmem [#allocation7], %s265
        // Predicated region
        $region41: #{tpu_custom_call.1} parent=31 // pred_check
          %p267 = pneg %p114
        $region42: #{tpu_custom_call.1} parent=31 // pred_check_branch
          %269 = sbr.rel (%p267) target = $region44
        $region43: #{tpu_custom_call.1} parent=31 // pred_region
          %270 = dma.done %s263, 512
        $region44: #{tpu_custom_call.1} parent=31 // pred_fallthru
          _
        %s271 = sand.u32 %s45, 1
        %s272 = scalar_lea.sflag [#allocation3], %s271
        %s273 = sand.u32 %s45, 1
        %s274 = smul.addr %s273, 32
        %s275 = scalar_lea.vmem [#allocation2], %s274
        %p276 = pneg %p58
        %p277 = pneg %p55
        %s278 = sand.u32 %s23, 1
        %s279 = scalar_lea.sflag [#allocation6], %s278
        %s280 = sand.u32 %s73, 1
        %s281 = smul.addr %s280, 32
        %s282 = scalar_lea.vmem [#allocation5], %s281
        %p283 = pneg %p86
        %p284 = pneg %p83
        %s285 = sand.u32 %s23, 1
        %s286 = scalar_lea.sflag [#allocation6], %s285
        %s287 = sand.u32 %s101, 1
        %s288 = smul.addr %s287, 32
        %s289 = scalar_lea.vmem [#allocation7], %s288
        %p290 = pneg %p114
        %p291 = pneg %p111
        %p292 = pneg %p140
        %p293 = pneg %p137
        %s294 = sand.u32 %s127, 1
        %s295 = scalar_lea.sflag [#allocation4], %s294
        %s296 = sand.u32 %s127, 1
        %s297 = smul.addr %s296, 8
        %s298 = scalar_lea.vmem [#allocation8], %s297
        %s299 = smul.u32 4, %s28
        %s300 = ssub.s32 1, %s299
        %s301 = smul.u32 128, %s300
        %s302 = smul.u32 4, %s28
        %s303 = ssub.s32 1, %s302
        %s304 = smul.u32 128, %s303
        %s305 = smul.u32 4, %s28
        %s306 = ssub.s32 1, %s305
        %s307 = smul.u32 128, %s306
        %p308 = scmp.eq.s32.totalorder %s28, 0
        // Predicated region
        $region45: #{tpu_custom_call.1} parent=31 // pred_check
          %p309 = pneg %p308
        $region46: #{tpu_custom_call.1} parent=31 // pred_check_branch
          %311 = sbr.rel (%p309) target = $region48
        $region47: #{tpu_custom_call.1} parent=31 // pred_region
          %vm312 = vcmask 130048
          %313 = vst.msk [vmem:[%s298] sm:$0xff] %vm312, 0.0
        $region48: #{tpu_custom_call.1} parent=31 // pred_fallthru
          _
        %v314 = vld [vmem:[%s248] sm:$0xff]
        %v315 = vld [vmem:[%s248 + $0x8] sm:$0xff]
        %v316 = vld [vmem:[%s248 + $0x10] sm:$0xff]
        %v317 = vld [vmem:[%s248 + $0x18] sm:$0xff]
        %v318 = vld [vmem:[%s257] sm:$0xff]
        %v319 = vld [vmem:[%s257 + $0x8] sm:$0xff]
        %v320 = vld [vmem:[%s257 + $0x10] sm:$0xff]
        %v321 = vld [vmem:[%s257 + $0x18] sm:$0xff]
        %v322 = vld [vmem:[%s266] sm:$0xff]
        %v323 = vld [vmem:[%s266 + $0x8] sm:$0xff]
        %v324 = vld [vmem:[%s266 + $0x10] sm:$0xff]
        %v325 = vld [vmem:[%s266 + $0x18] sm:$0xff]
        %v326 = vand.u32 2147483647, %v314
        %v327 = vand.u32 2147483647, %v315
        %v328 = vand.u32 2147483647, %v316
        %v329 = vand.u32 2147483647, %v317
        %v330 = vsub.f32 0.0, %v326
        %v331 = vsub.f32 0.0, %v327
        %v332 = vsub.f32 0.0, %v328
        %v333 = vsub.f32 0.0, %v329
        %v334 = vmul.f32 %v330, 1.442695
        %v335 = vpow.pop %v334
        %v336 = vmul.f32 %v331, 1.442695
        %v337 = vpow.pop %v336
        %v338 = vmul.f32 %v332, 1.442695
        %v339 = vpow.pop %v338
        %v340 = vmul.f32 %v333, 1.442695
        %v341 = vpow.pop %v340
        %v342 = vadd.f32 %v335, 1.0
        %v343 = vadd.f32 %v337, 1.0
        %v344 = vadd.f32 %v339, 1.0
        %v345 = vadd.f32 %v341, 1.0
        %v346 = vrcp.pop %v342
        %v347 = vrcp.pop %v343
        %v348 = vrcp.pop %v344
        %v349 = vrcp.pop %v345
        %vm350 = vcmp.ge.f32.partialorder %v314, 0.0
        %vm351 = vcmp.ge.f32.partialorder %v315, 0.0
        %vm352 = vcmp.ge.f32.partialorder %v316, 0.0
        %vm353 = vcmp.ge.f32.partialorder %v317, 0.0
        %v354 = vsel %vm350, 1.0, %v335
        %v355 = vsel %vm351, 1.0, %v337
        %v356 = vsel %vm352, 1.0, %v339
        %v357 = vsel %vm353, 1.0, %v341
        %v358 = vmul.f32 %v354, %v346
        %v359 = vmul.f32 %v355, %v347
        %v360 = vmul.f32 %v356, %v348
        %v361 = vmul.f32 %v357, %v349
        %v362 = vmul.f32 %v358, %v358
        %v363 = vmul.f32 %v359, %v359
        %v364 = vmul.f32 %v360, %v360
        %v365 = vmul.f32 %v361, %v361
        %v366 = vmul.f32 %v362, 0.75
        %v367 = vmul.f32 %v363, 0.75
        %v368 = vmul.f32 %v364, 0.75
        %v369 = vmul.f32 %v365, 0.75
        %v370 = vsub.f32 1.0, %v322
        %v371 = vsub.f32 1.0, %v323
        %v372 = vsub.f32 1.0, %v324
        %v373 = vsub.f32 1.0, %v325
        %v374 = vmul.f32 %v366, %v370
        %v375 = vmul.f32 %v367, %v371
        %v376 = vmul.f32 %v368, %v372
        %v377 = vmul.f32 %v369, %v373
        %v378 = vmul.f32 %v318, %v322
        %v379 = vmul.f32 %v319, %v323
        %v380 = vmul.f32 %v320, %v324
        %v381 = vmul.f32 %v321, %v325
        %v382 = vadd.f32 %v374, %v378
        %v383 = vadd.f32 %v375, %v379
        %v384 = vadd.f32 %v376, %v380
        %v385 = vadd.f32 %v377, %v381
        %v386 = vmax.f32 %v314, 0.0
        %v387 = vmax.f32 %v315, 0.0
        %v388 = vmax.f32 %v316, 0.0
        %v389 = vmax.f32 %v317, 0.0
        %v390 = vmul.f32 %v314, %v318
        %v391 = vmul.f32 %v315, %v319
        %v392 = vmul.f32 %v316, %v320
        %v393 = vmul.f32 %v317, %v321
        %v394 = vsub.f32 %v386, %v390
        %v395 = vsub.f32 %v387, %v391
        %v396 = vsub.f32 %v388, %v392
        %v397 = vsub.f32 %v389, %v393
        %v398 = vadd.f32 %v335, 1.0
        %v399 = vlog2.pop %v398
        %v400 = vmul.f32 %v399, 0.6931472
        %v401 = vmul.f32 -0.5, %v335
        %v402 = vadd.f32 %v401, 1.0
        %v403 = vmul.f32 %v402, %v335
        %v404 = vand.u32 2147483647, %v335
        %vm405 = vcmp.lt.f32.partialorder %v404, 0.0004427343
        %v406 = vsel %vm405, %v403, %v400
        %v407 = vadd.f32 %v337, 1.0
        %v408 = vlog2.pop %v407
        %v409 = vmul.f32 %v408, 0.6931472
        %v410 = vmul.f32 -0.5, %v337
        %v411 = vadd.f32 %v410, 1.0
        %v412 = vmul.f32 %v411, %v337
        %v413 = vand.u32 2147483647, %v337
        %vm414 = vcmp.lt.f32.partialorder %v413, 0.0004427343
        %v415 = vsel %vm414, %v412, %v409
        %v416 = vadd.f32 %v339, 1.0
        %v417 = vlog2.pop %v416
        %v418 = vmul.f32 %v417, 0.6931472
        %v419 = vmul.f32 -0.5, %v339
        %v420 = vadd.f32 %v419, 1.0
        %v421 = vmul.f32 %v420, %v339
        %v422 = vand.u32 2147483647, %v339
        %vm423 = vcmp.lt.f32.partialorder %v422, 0.0004427343
        %v424 = vsel %vm423, %v421, %v418
        %v425 = vadd.f32 %v341, 1.0
        %v426 = vlog2.pop %v425
        %v427 = vmul.f32 %v426, 0.6931472
        %v428 = vmul.f32 -0.5, %v341
        %v429 = vadd.f32 %v428, 1.0
        %v430 = vmul.f32 %v429, %v341
        %v431 = vand.u32 2147483647, %v341
        %vm432 = vcmp.lt.f32.partialorder %v431, 0.0004427343
        %v433 = vsel %vm432, %v430, %v427
        %v434 = vadd.f32 %v394, %v406
        %v435 = vadd.f32 %v395, %v415
        %v436 = vadd.f32 %v396, %v424
        %v437 = vadd.f32 %v397, %v433
        %v438 = vmul.f32 %v434, %v382
        %v439 = vmul.f32 %v435, %v383
        %v440 = vmul.f32 %v436, %v384
        %v441 = vmul.f32 %v437, %v385
        %s442 = smul.u32 %s28, 32
        %v443 = vlaneseq
        %v444 = vshrl.u32 %v443, 7
        %v445 = vadd.s32 %v444, 8
        %v446 = vadd.s32 %v444, 16
        %v447 = vadd.s32 %v444, 24
        %v448 = vstv %s442
        %v449 = vadd.s32 %v448, %v444
        %v450 = vadd.s32 %v448, %v445
        %v451 = vadd.s32 %v448, %v446
        %v452 = vadd.s32 %v448, %v447
        %vm453 = vcmp.lt.s32.totalorder %v449, 8
        %vm454 = vcmp.lt.s32.totalorder %v450, 8
        %vm455 = vcmp.lt.s32.totalorder %v451, 8
        %vm456 = vcmp.lt.s32.totalorder %v452, 8
        %v457 = vsel %vm453, %v438, 0.0
        %v458 = vsel %vm454, %v439, 0.0
        %v459 = vsel %vm455, %v440, 0.0
        %v460 = vsel %vm456, %v441, 0.0
        %v461 = vld [vmem:[%s298] sm:$0xff]
        %vm462 = vcmask 130048
        %v463 = vsel %vm462, %v457, 0.0
        %v464 = vsel %vm462, %v458, 0.0
        %v465 = vadd.f32 %v463, %v464
        %v466 = vsel %vm462, %v459, 0.0
        %v467 = vadd.f32 %v465, %v466
        %v468 = vsel %vm462, %v460, 0.0
        %v469 = vadd.f32 %v467, %v468
        %v470 = vadd.f32 %v461, %v469
        %471 = vst.msk [vmem:[%s298] sm:$0xff] %vm462, %v470
        %s472 = sand.u32 %s127, 1
        %s473 = scalar_lea.sflag [#allocation4], %s472
        %s474 = sand.u32 %s127, 1
        %s475 = smul.addr %s474, 8
        %s476 = scalar_lea.vmem [#allocation8], %s475
        // Predicated region
        $region49: #{tpu_custom_call.1} parent=31 // pred_check
          %p477 = pneg %p137
        $region50: #{tpu_custom_call.1} parent=31 // pred_check_branch
          %479 = sbr.rel (%p477) target = $region52
        $region51: #{tpu_custom_call.1} parent=31 // pred_region
          %s481 = ssub.s32 128, 128
          %482 = vsyncadd %s473, %s481
          %s483 = smul.addr %s27, 128
          %s484 = scalar_lea.hbm %s3, %s483
          %s486 = sshll.u32 %s476, 4
          %s487 = int_to_ptr.vmem [resolvable:$true] %s486
          %489 = dma.vmem_to_hbm [thread:$0]  %s487, 128, %s484, %s473
        $region52: #{tpu_custom_call.1} parent=31 // pred_fallthru
          _
      $region32: #{tpu_custom_call.1} parent=5 // pred_fallthru
        _
      %p490 = scmp.le.s32.totalorder 2, %s18
      // Predicated region
      $region53: #{tpu_custom_call.1} parent=5 // pred_check
        %p491 = pneg %p490
      $region54: #{tpu_custom_call.1} parent=5 // pred_check_branch
        %493 = sbr.rel (%p491) target = $region56
      $region55: #{tpu_custom_call.1} parent=5 // pred_region
        %s494 = ssub.s32 %s18, 2
        // Predicated region
        $region57: #{tpu_custom_call.1} parent=55 // pred_check
          %p495 = pneg %p143
        $region58: #{tpu_custom_call.1} parent=55 // pred_check_branch
          %497 = sbr.rel (%p495) target = $region60
        $region59: #{tpu_custom_call.1} parent=55 // pred_region
          %s498 = sand.u32 %s128, 1
          %s499 = scalar_lea.sflag [#allocation4], %s498
          %s500 = sand.u32 %s128, 1
          %s501 = smul.addr %s500, 8
          %s502 = scalar_lea.vmem [#allocation8], %s501
          %503 = dma.done %s499, 128
        $region60: #{tpu_custom_call.1} parent=55 // pred_fallthru
          _
      $region56: #{tpu_custom_call.1} parent=5 // pred_fallthru
        _
    $region6: #{tpu_custom_call.1} parent=1 // loop_footer
      %s22 = sadd.s32 1, %s18
    $region7: #{tpu_custom_call.1} parent=1 // loop_footer_branch
      %17 = sbr.rel target = $region3
    $region8: #{tpu_custom_call.1} parent=1 // loop_exit
      _
    %504 = vsyncpa [#allocation3], 1
    %s505 = scalar_lea.sflag [#allocation3], 1
    %506 = vsyncpa %s505, 1
    %507 = vsyncpa [#allocation6], 1
    %s508 = scalar_lea.sflag [#allocation6], 1
    %509 = vsyncpa %s508, 1
    %510 = vsyncpa [#allocation4], 1
    %s511 = scalar_lea.sflag [#allocation4], 1
    %512 = vsyncpa %s511, 1

</llo_original>
